<compile_context>
chip_gen: v7x
topology: tpu7x:2x2x1
jax: 0.10.0
libtpu: 0.0.40
codegen_flags: <defaults>
</compile_context>

<pallas_src>
import functools

import jax
import jax.numpy as jnp
from jax.experimental import pallas as pl
from jax.experimental.pallas import tpu as pltpu

_LANES = 128
# Double-buffered input footprint target: 2 buffers x (x block + t block).
# 16 MiB leaves headroom inside v7x's 32 MiB scoped VMEM; for f32 inputs this
# gives 8192-row blocks (4 MiB per input block).
_INPUT_VMEM_BUDGET = 16 * 1024 * 1024
# Raise v5e's 16 MiB default scoped limit; stays below v7x's 64 MiB physical.
_VMEM_LIMIT_BYTES = 32 * 1024 * 1024


def _dice_partials_kernel(x_ref, t_ref, out_ref, *, last_rows, needs_mask):
    """Per-block partials: out[0,0,:] = sum_rows(s*t), out[0,1,:] = sum_rows(s+t)."""
    x = x_ref[...].astype(jnp.float32)
    t = t_ref[...].astype(jnp.float32)
    s = jax.nn.sigmoid(x)

    def _write(sv, tv):
        out_ref[0, 0, :] = jnp.sum(sv * tv, axis=0)   # intersection partial (per lane)
        out_ref[0, 1, :] = jnp.sum(sv + tv, axis=0)   # fused sum(s) + sum(t) partial

    if not needs_mask:
        _write(s, t)
    else:
        is_last = pl.program_id(0) == pl.num_programs(0) - 1

        @pl.when(jnp.logical_not(is_last))
        def _full_block():
            _write(s, t)

        @pl.when(is_last)
        def _ragged_block():
            # Trailing rows of the last block's VMEM buffer are undefined
            # (may hold NaN/Inf) — select them out of both operands.
            keep = jax.lax.broadcasted_iota(jnp.int32, x.shape, 0) < last_rows
            _write(jnp.where(keep, s, 0.0), jnp.where(keep, t, 0.0))


def _pick_block_rows(block_rows, x_dtype, t_dtype):
    if block_rows is None:
        per_row_bytes = 2 * _LANES * (
            jnp.dtype(x_dtype).itemsize + jnp.dtype(t_dtype).itemsize)
        block_rows = _INPUT_VMEM_BUDGET // per_row_bytes
    # Multiple of 32 keeps (br, 128) legal for f32 / bf16 / int8 min-tiles.
    return max(32, (int(block_rows) // 32) * 32)


def dice_loss(inputs, targets, smooth=1.0, block_rows=None):
    """Pallas TPU implementation of DiceLoss.forward. Returns a scalar float32."""
    assert inputs.shape == targets.shape
    n = int(inputs.size)
    assert n > 0

    x_flat = inputs.reshape(-1)      # metadata-only for contiguous inputs
    t_flat = targets.reshape(-1)

    rows = n // _LANES               # 128-aligned prefix goes through the kernel
    n_main = rows * _LANES

    inter = jnp.float32(0.0)
    denom = jnp.float32(0.0)

    if rows > 0:
        x_main = x_flat if n_main == n else x_flat[:n_main]
        t_main = t_flat if n_main == n else t_flat[:n_main]
        x2 = x_main.reshape(rows, _LANES)
        t2 = t_main.reshape(rows, _LANES)

        br = _pick_block_rows(block_rows, x2.dtype, t2.dtype)
        if rows <= br:
            br = rows                # single block == full array dims
        nb = pl.cdiv(rows, br)
        last_rows = rows - (nb - 1) * br
        needs_mask = last_rows != br

        kernel = functools.partial(
            _dice_partials_kernel, last_rows=last_rows, needs_mask=needs_mask)

        partials = pl.pallas_call(
            kernel,
            grid=(nb,),
            out_shape=jax.ShapeDtypeStruct((nb, 2, _LANES), jnp.float32),
            in_specs=[
                pl.BlockSpec((br, _LANES), lambda i: (i, 0)),
                pl.BlockSpec((br, _LANES), lambda i: (i, 0)),
            ],
            # Each grid step owns a disjoint (1, 2, 128) output tile, so the
            # axis is truly parallel (megacore-shardable on v7x).
            out_specs=pl.BlockSpec((1, 2, _LANES), lambda i: (i, 0, 0)),
            compiler_params=pltpu.CompilerParams(
                dimension_semantics=("parallel",),
                vmem_limit_bytes=_VMEM_LIMIT_BYTES,
            ),
        )(x2, t2)

        sums = jnp.sum(partials, axis=(0, 2))   # tiny JAX epilogue
        inter = sums[0]
        denom = sums[1]

    if n_main != n:
        # <128-element tail handled in plain JAX (native dtype, cast here).
        x_tail = x_flat[n_main:].astype(jnp.float32)
        t_tail = t_flat[n_main:].astype(jnp.float32)
        s_tail = jax.nn.sigmoid(x_tail)
        inter = inter + jnp.sum(s_tail * t_tail)
        denom = denom + jnp.sum(s_tail + t_tail)

    smooth = jnp.float32(smooth)
    dice = (2.0 * inter + smooth) / (denom + smooth)
    return jnp.float32(1.0) - dice


if __name__ == "__main__":
    key = jax.random.PRNGKey(0)
    keys = jax.random.split(key, 6)

    def ref_dice_loss(x, t, smooth=1.0):
        s = jax.nn.sigmoid(x.astype(jnp.float32)).reshape(-1)
        tt = t.astype(jnp.float32).reshape(-1)
        inter = jnp.sum(s * tt)
        return 1.0 - (2.0 * inter + smooth) / (jnp.sum(s) + jnp.sum(tt) + smooth)

    # Case 1: NCHW logits/targets, lane-aligned, single block (default tiling).
    x1 = jax.random.normal(keys[0], (2, 4, 16, 16), dtype=jnp.float32)
    t1 = (jax.random.uniform(keys[1], (2, 4, 16, 16)) > 0.5).astype(jnp.float32)
    loss1 = dice_loss(x1, t1, smooth=1.0)
    jax.block_until_ready(loss1)
    assert jnp.allclose(loss1, ref_dice_loss(x1, t1), atol=1e-5, rtol=1e-5), (
        loss1, ref_dice_loss(x1, t1))

    # Case 2: multi-block grid with a ragged last block (exercises the
    # parallel per-block partials and the last-step-only row mask).
    x2 = jax.random.normal(keys[2], (2, 4, 10, 128), dtype=jnp.float32)
    t2 = (jax.random.uniform(keys[3], (2, 4, 10, 128)) > 0.5).astype(jnp.float32)
    loss2 = dice_loss(x2, t2, smooth=1.0, block_rows=32)
    jax.block_until_ready(loss2)
    assert jnp.allclose(loss2, ref_dice_loss(x2, t2), atol=1e-5, rtol=1e-5), (
        loss2, ref_dice_loss(x2, t2))

    # Case 3: non-lane-aligned element count + bf16 logits (native-dtype
    # streaming; <128-element tail folded in with plain JAX).
    x3 = jax.random.normal(keys[4], (3, 5, 7, 11), dtype=jnp.bfloat16)
    t3 = (jax.random.uniform(keys[5], (3, 5, 7, 11)) > 0.5).astype(jnp.float32)
    loss3 = dice_loss(x3, t3, smooth=1.0)
    jax.block_until_ready(loss3)
    assert jnp.allclose(loss3, ref_dice_loss(x3, t3), atol=1e-5, rtol=1e-5), (
        loss3, ref_dice_loss(x3, t3))

    print("KERNEL_OK")
</pallas_src>

<mosaic_0001>
module attributes {stable_mosaic.version = 11 : i64} {
  func.func @_dice_partials_kernel(%arg0: i32, %arg1: memref<16x128xf32, #tpu.memory_space<vmem>>, %arg2: memref<16x128xf32, #tpu.memory_space<vmem>>, %arg3: memref<1x2x128xf32, #tpu.memory_space<vmem>>) attributes {dimension_semantics = [#tpu.dimension_semantics<parallel>], iteration_bounds = array<i64: 1>, scalar_prefetch = 0 : i64, scratch_operands = 0 : i64, tpu.core_type = #tpu.core_type<tc>, window_params = [{transform_indices = @transform_0, window_bounds = array<i64: 16, 128>}, {transform_indices = @transform_1, window_bounds = array<i64: 16, 128>}, {transform_indices = @transform_2, window_bounds = array<i64: 1, 2, 128>}]} {
    %c0 = arith.constant 0 : index
    %c0_0 = arith.constant 0 : index
    %0 = vector.load %arg1[%c0, %c0_0] : memref<16x128xf32, #tpu.memory_space<vmem>>, vector<16x128xf32>
    %c0_1 = arith.constant 0 : index
    %c0_2 = arith.constant 0 : index
    %1 = vector.load %arg2[%c0_1, %c0_2] : memref<16x128xf32, #tpu.memory_space<vmem>>, vector<16x128xf32>
    %2 = arith.negf %0 : vector<16x128xf32>
    %3 = math.exp %2 : vector<16x128xf32>
    %cst = arith.constant 1.000000e+00 : f32
    %4 = vector.broadcast %cst : f32 to vector<16x128xf32>
    %5 = arith.addf %4, %3 : vector<16x128xf32>
    %6 = arith.divf %4, %5 : vector<16x128xf32>
    %7 = arith.mulf %6, %1 : vector<16x128xf32>
    %cst_3 = arith.constant dense<0.000000e+00> : vector<128xf32>
    %8 = vector.multi_reduction <add>, %7, %cst_3 [0] : vector<16x128xf32> to vector<128xf32>
    %c0_4 = arith.constant 0 : index
    %c0_5 = arith.constant 0 : index
    %c0_6 = arith.constant 0 : index
    %9 = vector.load %arg3[%c0_4, %c0_5, %c0_6] : memref<1x2x128xf32, #tpu.memory_space<vmem>>, vector<1x1x128xf32>
    %10 = vector.shape_cast %9 : vector<1x1x128xf32> to vector<128xf32>
    %11 = vector.shape_cast %8 : vector<128xf32> to vector<1x1x128xf32>
    tpu.vector_store %arg3[%c0_4, %c0_5, %c0_6], %11 {strides = array<i32>} : memref<1x2x128xf32, #tpu.memory_space<vmem>>, vector<1x1x128xf32>,
    %12 = arith.addf %6, %1 : vector<16x128xf32>
    %cst_7 = arith.constant dense<0.000000e+00> : vector<128xf32>
    %13 = vector.multi_reduction <add>, %12, %cst_7 [0] : vector<16x128xf32> to vector<128xf32>
    %c0_8 = arith.constant 0 : index
    %c1 = arith.constant 1 : index
    %c0_9 = arith.constant 0 : index
    %14 = vector.load %arg3[%c0_8, %c1, %c0_9] : memref<1x2x128xf32, #tpu.memory_space<vmem>>, vector<1x1x128xf32>
    %15 = vector.shape_cast %14 : vector<1x1x128xf32> to vector<128xf32>
    %16 = vector.shape_cast %13 : vector<128xf32> to vector<1x1x128xf32>
    tpu.vector_store %arg3[%c0_8, %c1, %c0_9], %16 {strides = array<i32>} : memref<1x2x128xf32, #tpu.memory_space<vmem>>, vector<1x1x128xf32>,
    return
  }
  func.func @transform_0(%arg0: i32) -> (i32, i32) {
    %c0_i32 = arith.constant 0 : i32
    %c0_i32_0 = arith.constant 0 : i32
    return %arg0, %c0_i32 : i32, i32
  }
  func.func @transform_1(%arg0: i32) -> (i32, i32) {
    %c0_i32 = arith.constant 0 : i32
    %c0_i32_0 = arith.constant 0 : i32
    return %arg0, %c0_i32 : i32, i32
  }
  func.func @transform_2(%arg0: i32) -> (i32, i32, i32) {
    %c0_i32 = arith.constant 0 : i32
    %c0_i32_0 = arith.constant 0 : i32
    %c0_i32_1 = arith.constant 0 : i32
    return %arg0, %c0_i32, %c0_i32_0 : i32, i32, i32
  }
}

</mosaic_0001>

<llo_original>
// kernel: tpu_custom_call.1
$region0: #{tpu_custom_call.1}
  #allocation0 [shape = 'u32[]', space=smem, size = 0x4, offset = 0x4, fixed_abs, tag = 'smem constant byte address 0x4 - core index']
  #allocation1 [shape = 'u32[144,128]{1,0:T(1,128)}', space=vmem, size = 0x12000, scoped, tag = 'internal scratch']
  %s0 = inlined_call_operand.hbm [shape: f32[16,128], index: 0, kind: input, shape index: {}]
  %s1 = inlined_call_operand.hbm [shape: f32[16,128], index: 1, kind: input, shape index: {}]
  %s2 = inlined_call_operand.hbm [shape: f32[1,2,128], index: 2, kind: output, shape index: {}]
  %s3 = sld [smem:[#allocation0]]
  $region26: #{tpu_custom_call.1} parent=0
    _
  %s5 = ssub.s32 1, %s3
  %s6 = scalar_select 0, %s5, %s3
  $region1: #{tpu_custom_call.1} parent=0
    #allocation2 [shape = 'u8[8192]{0}', space=vmem, size = 0x2000, scoped, tag = 'input window, operand 0, single buffered']
    #allocation3 [shape = 's32[1]{0}', space=sflag, size = 0x4, scoped, tag = 'scoped memory for tpu_custom_call.1']
    #allocation4 [shape = 's32[1]{0}', space=sflag, size = 0x4, scoped, tag = 'scoped memory for tpu_custom_call.1']
    #allocation5 [shape = 'u8[8192]{0}', space=vmem, size = 0x2000, scoped, tag = 'input window, operand 1, single buffered']
    #allocation6 [shape = 's32[1]{0}', space=sflag, size = 0x4, scoped, tag = 'scoped memory for tpu_custom_call.1']
    #allocation7 [shape = 'u8[1024]{0}', space=vmem, size = 0x400, scoped, tag = 'output window, operand 0, single buffered']
    %7 = vsyncpa [#allocation3], 0
    %8 = vsyncpa [#allocation6], 0
    %9 = vsyncpa [#allocation4], 0
    // Predicated region
    $region2: #{tpu_custom_call.1} parent=1 // pred_check
      _
    $region3: #{tpu_custom_call.1} parent=1 // pred_check_branch
      %11 = sbr.rel (0) target = $region5
    $region4: #{tpu_custom_call.1} parent=1 // pred_region
      %s13 = ssub.s32 256, 256
      %14 = vsyncadd [#allocation3], %s13
      %s15 = sshll.u32 [#allocation2], 4
      %s16 = int_to_ptr.vmem [resolvable:$true] %s15
      %21 = dma.hbm_to_vmem [thread:$0]  %s0, 256, %s16, [#allocation3], 128, 128, 8
    $region5: #{tpu_custom_call.1} parent=1 // pred_fallthru
      _
    // Predicated region
    $region6: #{tpu_custom_call.1} parent=1 // pred_check
      _
    $region7: #{tpu_custom_call.1} parent=1 // pred_check_branch
      %23 = sbr.rel (0) target = $region9
    $region8: #{tpu_custom_call.1} parent=1 // pred_region
      %s25 = ssub.s32 256, 256
      %26 = vsyncadd [#allocation6], %s25
      %s27 = sshll.u32 [#allocation5], 4
      %s28 = int_to_ptr.vmem [resolvable:$true] %s27
      %33 = dma.hbm_to_vmem [thread:$0]  %s1, 256, %s28, [#allocation6], 128, 128, 8
    $region9: #{tpu_custom_call.1} parent=1 // pred_fallthru
      _
    // Predicated region
    $region10: #{tpu_custom_call.1} parent=1 // pred_check
      _
    $region11: #{tpu_custom_call.1} parent=1 // pred_check_branch
      %35 = sbr.rel (0) target = $region13
    $region12: #{tpu_custom_call.1} parent=1 // pred_region
      %36 = dma.done [#allocation3], 256
    $region13: #{tpu_custom_call.1} parent=1 // pred_fallthru
      _
    // Predicated region
    $region14: #{tpu_custom_call.1} parent=1 // pred_check
      _
    $region15: #{tpu_custom_call.1} parent=1 // pred_check_branch
      %38 = sbr.rel (0) target = $region17
    $region16: #{tpu_custom_call.1} parent=1 // pred_region
      %39 = dma.done [#allocation6], 256
    $region17: #{tpu_custom_call.1} parent=1 // pred_fallthru
      _
    %v40 = vld [vmem:[#allocation2] sm:$0xff]
    %v41 = vld [vmem:[#allocation2 + $0x8] sm:$0xff]
    %v42 = vld [vmem:[#allocation5] sm:$0xff]
    %v43 = vld [vmem:[#allocation5 + $0x8] sm:$0xff]
    %v44 = vxor.u32 %v40, 2147483648
    %v45 = vxor.u32 %v41, 2147483648
    %v46 = vmul.f32 %v44, 1.442695
    %v47 = vpow.pop %v46
    %v48 = vmul.f32 %v45, 1.442695
    %v49 = vpow.pop %v48
    %v50 = vadd.f32 %v47, 1.0
    %v51 = vadd.f32 %v49, 1.0
    %v52 = vrcp.pop %v50
    %v53 = vmul.f32 1.0, %v52
    %v54 = vrcp.pop %v51
    %v55 = vmul.f32 1.0, %v54
    %v56 = vmul.f32 %v53, %v42
    %v57 = vmul.f32 %v55, %v43
    %v58 = vadd.f32 %v56, %v57
    %v59 = vrot.slane %v58, 4
    %v60 = vadd.f32 %v58, %v59
    %v61 = vrot.slane %v60, 2
    %v62 = vadd.f32 %v60, %v61
    %v63 = vrot.slane %v62, 1
    %v64 = vadd.f32 %v62, %v63
    %65 = vst [vmem:[#allocation7] sm:$0x1] %v64
    %v66 = vadd.f32 %v53, %v42
    %v67 = vadd.f32 %v55, %v43
    %v68 = vadd.f32 %v66, %v67
    %v69 = vrot.slane %v68, 4
    %v70 = vadd.f32 %v68, %v69
    %v71 = vrot.slane %v70, 2
    %v72 = vadd.f32 %v70, %v71
    %v73 = vrot.slane %v72, 1
    %v74 = vadd.f32 %v72, %v73
    %75 = vst [vmem:[#allocation7 + $0x1] sm:$0x1] %v74
    // Predicated region
    $region18: #{tpu_custom_call.1} parent=1 // pred_check
      _
    $region19: #{tpu_custom_call.1} parent=1 // pred_check_branch
      %77 = sbr.rel (0) target = $region21
    $region20: #{tpu_custom_call.1} parent=1 // pred_region
      %s79 = ssub.s32 32, 32
      %80 = vsyncadd [#allocation4], %s79
      %s82 = sshll.u32 [#allocation7], 4
      %s83 = int_to_ptr.vmem [resolvable:$true] %s82
      %85 = dma.vmem_to_hbm [thread:$0]  %s83, 32, %s2, [#allocation4]
    $region21: #{tpu_custom_call.1} parent=1 // pred_fallthru
      _
    // Predicated region
    $region22: #{tpu_custom_call.1} parent=1 // pred_check
      _
    $region23: #{tpu_custom_call.1} parent=1 // pred_check_branch
      %87 = sbr.rel (0) target = $region25
    $region24: #{tpu_custom_call.1} parent=1 // pred_region
      %88 = dma.done [#allocation4], 32
    $region25: #{tpu_custom_call.1} parent=1 // pred_fallthru
      _
    %89 = vsyncpa [#allocation3], 1
    %90 = vsyncpa [#allocation6], 1
    %91 = vsyncpa [#allocation4], 1

</llo_original>
